<compile_context>
chip_gen: v7x
topology: tpu7x:2x2x1
jax: 0.10.0
libtpu: 0.0.40
codegen_flags: <defaults>
</compile_context>

<pallas_src>
import math

import jax
import jax.numpy as jnp
from jax import lax
from jax.experimental import pallas as pl
from jax.experimental.pallas import tpu as pltpu

N = 16                      # mirrors the reference script's N
LAYERS = [7, 32, 32, 1]     # layers[0] must match encoding width (7 * d, d=1)

_TWO_PI = 2.0 * math.pi
_HALF_PI = 0.5 * math.pi


def _round_up(x, m):
    return ((x + m - 1) // m) * m


def _choose_tiling(batch, b_tile):
    """Pick (tile, padded_batch): tile is a multiple of 128, >=2 grid steps
    whenever the 128-rounded batch allows it (v7x megacore), and padding is
    bounded by ~128 lanes per grid step."""
    b128 = _round_up(batch, 128)
    cap = max(128, (int(b_tile) // 128) * 128)      # guard: multiple of 128
    n = -(-b128 // cap)                             # ceil-div
    if b128 >= 256:
        n = max(n, 2)                               # let v7x's 2 TCs both work
    bt = _round_up(-(-b128 // n), 128)
    n = -(-b128 // bt)
    return bt, n * bt


def _dnn_kernel(x_ref, w0_ref, w1_ref, b1_ref, w2_ref, b2_ref, out_ref):
    bt = x_ref.shape[1]
    x8 = jnp.broadcast_to(x_ref[...], (8, bt))            # sublane broadcast

    # Dense Fourier encoding: rows = [1, cos(wx), cos(2wx), cos(4wx),
    #                                 sin(wx), sin(2wx), sin(4wx), 0-pad]
    r = lax.broadcasted_iota(jnp.int32, (8, bt), 0)
    freq = jnp.where((r == 1) | (r == 4), jnp.float32(_TWO_PI),
           jnp.where((r == 2) | (r == 5), jnp.float32(2.0 * _TWO_PI),
           jnp.where((r == 3) | (r == 6), jnp.float32(4.0 * _TWO_PI),
                     jnp.float32(0.0))))
    shift = jnp.where(r <= 3, jnp.float32(0.0), jnp.float32(_HALF_PI))
    enc = jnp.cos(freq * x8 - shift)                       # (8, Bt); one EUP op

    # layer_0 (+ folded bias) + ReLU
    h = jnp.maximum(
        jnp.dot(w0_ref[...], enc, preferred_element_type=jnp.float32), 0.0)
    # layer_1 + ReLU
    h = jnp.maximum(
        jnp.dot(w1_ref[...], h, preferred_element_type=jnp.float32) + b1_ref[...],
        0.0)
    # layer_2 (no activation)
    out_ref[...] = (
        jnp.dot(w2_ref[...], h, preferred_element_type=jnp.float32) + b2_ref[...]
    )


def dnn_forward(x, params, *, b_tile=32768):
    """x: (B, 1) float32; params: list of (W (out,in), b (out,1)). Returns (B, 1)."""
    B = x.shape[0]
    (w0, b0), (w1, b1), (w2, b2) = params

    # Fold b0 into W0's constant-feature column and pad K: 7 -> 8 sublanes
    # (column 7 is zero, matching the kernel's zero pad row).
    w0f = jnp.zeros((w0.shape[0], 8), jnp.float32)
    w0f = w0f.at[:, : w0.shape[1]].set(w0.astype(jnp.float32))
    w0f = w0f.at[:, 0].add(b0.reshape(-1).astype(jnp.float32))

    w1 = w1.astype(jnp.float32)
    b1 = b1.reshape(-1, 1).astype(jnp.float32)
    w2 = w2.astype(jnp.float32)
    b2 = b2.reshape(1, 1).astype(jnp.float32)

    bt, Bp = _choose_tiling(B, b_tile)
    x_row = jnp.pad(x.reshape(1, B).astype(jnp.float32), ((0, 0), (0, Bp - B)))

    def _const(shape):
        # Constant index map: DMA'd once, stays VMEM-resident across the grid.
        return pl.BlockSpec(shape, lambda i: (0, 0))

    out_row = pl.pallas_call(
        _dnn_kernel,
        out_shape=jax.ShapeDtypeStruct((1, Bp), jnp.float32),
        grid=(Bp // bt,),
        in_specs=[
            pl.BlockSpec((1, bt), lambda i: (0, i)),       # x tile (lane-dense)
            _const(w0f.shape), _const(w1.shape), _const(b1.shape),
            _const(w2.shape), _const(b2.shape),
        ],
        out_specs=pl.BlockSpec((1, bt), lambda i: (0, i)),
        compiler_params=pltpu.CompilerParams(
            dimension_semantics=("parallel",),
            vmem_limit_bytes=48 * 1024 * 1024,             # headroom, < v7x's 64 MiB
        ),
    )(x_row, w0f, w1, b1, w2, b2)

    return out_row[:, :B].reshape(B, 1)


def init_params(key, layers):
    """Deterministic init mimicking torch.nn.Linear default (uniform +-1/sqrt(fan_in)).

    Weights kept in torch's (out_dim, in_dim) layout; biases as (out_dim, 1).
    """
    params = []
    for i in range(len(layers) - 1):
        fan_in, fan_out = layers[i], layers[i + 1]
        key, kw, kb = jax.random.split(key, 3)
        bound = 1.0 / math.sqrt(fan_in)
        w_mat = jax.random.uniform(kw, (fan_out, fan_in), jnp.float32, -bound, bound)
        b = jax.random.uniform(kb, (fan_out, 1), jnp.float32, -bound, bound)
        params.append((w_mat, b))
    return params


def dnn_reference(x, params):
    """Pure-JAX reference of the PyTorch forward (for verification)."""
    w = _TWO_PI
    enc = jnp.concatenate(
        [0.0 * x + 1.0,
         jnp.cos(1 * w * x), jnp.cos(2 * w * x), jnp.cos(4 * w * x),
         jnp.sin(1 * w * x), jnp.sin(2 * w * x), jnp.sin(4 * w * x)],
        axis=-1,
    )
    h = enc
    for i, (w_mat, b) in enumerate(params):
        h = h @ w_mat.T + b.T
        if i < len(params) - 1:
            h = jnp.maximum(h, 0.0)
    return h


if __name__ == "__main__":
    key = jax.random.PRNGKey(0)
    params = init_params(key, LAYERS)

    # Case 1: the reference script's grid of N points in (0, 1), shape (16, 1).
    xs = jnp.linspace(1.0 / (2 * N), 1.0 - 1.0 / (2 * N), N, dtype=jnp.float32)
    x_small = xs.reshape(N, 1)
    out_small = jax.block_until_ready(dnn_forward(x_small, params))
    ref_small = dnn_reference(x_small, params)
    assert out_small.shape == (N, LAYERS[-1]), out_small.shape
    assert jnp.allclose(out_small, ref_small, atol=1e-4, rtol=1e-4), (
        f"max abs err = {jnp.max(jnp.abs(out_small - ref_small))}"
    )

    # Case 2: non-multiple-of-128 batch -> exercises padding + multi-step grid
    # (>=2 steps, v7x megacore path).
    key, kx = jax.random.split(key)
    x_big = jax.random.uniform(kx, (1000, 1), jnp.float32)
    out_big = jax.block_until_ready(dnn_forward(x_big, params))
    ref_big = dnn_reference(x_big, params)
    assert out_big.shape == (1000, 1), out_big.shape
    assert jnp.allclose(out_big, ref_big, atol=1e-4, rtol=1e-4), (
        f"max abs err = {jnp.max(jnp.abs(out_big - ref_big))}"
    )

    print("KERNEL_OK")
</pallas_src>

<mosaic_0001>
module attributes {stable_mosaic.version = 11 : i64} {
  func.func @_dnn_kernel(%arg0: i32, %arg1: memref<1x128xf32, #tpu.memory_space<vmem>>, %arg2: memref<32x8xf32, #tpu.memory_space<vmem>>, %arg3: memref<32x32xf32, #tpu.memory_space<vmem>>, %arg4: memref<32x1xf32, #tpu.memory_space<vmem>>, %arg5: memref<1x32xf32, #tpu.memory_space<vmem>>, %arg6: memref<1x1xf32, #tpu.memory_space<vmem>>, %arg7: memref<1x128xf32, #tpu.memory_space<vmem>>) attributes {dimension_semantics = [#tpu.dimension_semantics<parallel>], iteration_bounds = array<i64: 1>, scalar_prefetch = 0 : i64, scratch_operands = 0 : i64, tpu.core_type = #tpu.core_type<tc>, window_params = [{transform_indices = @transform_0, window_bounds = array<i64: 1, 128>}, {pipeline_mode = #tpu.pipeline_mode<synchronous>, transform_indices = @transform_1, window_bounds = array<i64: 32, 8>}, {pipeline_mode = #tpu.pipeline_mode<synchronous>, transform_indices = @transform_2, window_bounds = array<i64: 32, 32>}, {pipeline_mode = #tpu.pipeline_mode<synchronous>, transform_indices = @transform_3, window_bounds = array<i64: 32, 1>}, {pipeline_mode = #tpu.pipeline_mode<synchronous>, transform_indices = @transform_4, window_bounds = array<i64: 1, 32>}, {pipeline_mode = #tpu.pipeline_mode<synchronous>, transform_indices = @transform_5, window_bounds = array<i64: 1, 1>}, {transform_indices = @transform_6, window_bounds = array<i64: 1, 128>}]} {
    %c0 = arith.constant 0 : index
    %c0_0 = arith.constant 0 : index
    %0 = vector.load %arg1[%c0, %c0_0] : memref<1x128xf32, #tpu.memory_space<vmem>>, vector<1x128xf32>
    %1 = vector.shape_cast %0 : vector<1x128xf32> to vector<1x128xf32>
    %2 = vector.broadcast %1 : vector<1x128xf32> to vector<8x128xf32>
    %3 = tpu.iota {dimensions = array<i32: 0>} : vector<8x128xi32>
    %c1_i32 = arith.constant 1 : i32
    %4 = vector.broadcast %c1_i32 : i32 to vector<8x128xi32>
    %5 = arith.cmpi eq, %3, %4 : vector<8x128xi32>
    %c4_i32 = arith.constant 4 : i32
    %6 = vector.broadcast %c4_i32 : i32 to vector<8x128xi32>
    %7 = arith.cmpi eq, %3, %6 : vector<8x128xi32>
    %8 = arith.ori %5, %7 : vector<8x128xi1>
    %c2_i32 = arith.constant 2 : i32
    %9 = vector.broadcast %c2_i32 : i32 to vector<8x128xi32>
    %10 = arith.cmpi eq, %3, %9 : vector<8x128xi32>
    %c5_i32 = arith.constant 5 : i32
    %11 = vector.broadcast %c5_i32 : i32 to vector<8x128xi32>
    %12 = arith.cmpi eq, %3, %11 : vector<8x128xi32>
    %13 = arith.ori %10, %12 : vector<8x128xi1>
    %c3_i32 = arith.constant 3 : i32
    %14 = vector.broadcast %c3_i32 : i32 to vector<8x128xi32>
    %15 = arith.cmpi eq, %3, %14 : vector<8x128xi32>
    %c6_i32 = arith.constant 6 : i32
    %16 = vector.broadcast %c6_i32 : i32 to vector<8x128xi32>
    %17 = arith.cmpi eq, %3, %16 : vector<8x128xi32>
    %18 = arith.ori %15, %17 : vector<8x128xi1>
    %cst = arith.constant 25.1327419 : f32
    %cst_1 = arith.constant 0.000000e+00 : f32
    %19 = vector.broadcast %cst : f32 to vector<8x128xf32>
    %20 = vector.broadcast %cst_1 : f32 to vector<8x128xf32>
    %21 = arith.select %18, %19, %20 : vector<8x128xi1>, vector<8x128xf32>
    %cst_2 = arith.constant 12.566371 : f32
    %22 = vector.broadcast %cst_2 : f32 to vector<8x128xf32>
    %23 = arith.select %13, %22, %21 : vector<8x128xi1>, vector<8x128xf32>
    %cst_3 = arith.constant 6.28318548 : f32
    %24 = vector.broadcast %cst_3 : f32 to vector<8x128xf32>
    %25 = arith.select %8, %24, %23 : vector<8x128xi1>, vector<8x128xf32>
    %c3_i32_4 = arith.constant 3 : i32
    %26 = vector.broadcast %c3_i32_4 : i32 to vector<8x128xi32>
    %27 = arith.cmpi sle, %3, %26 : vector<8x128xi32>
    %cst_5 = arith.constant 0.000000e+00 : f32
    %cst_6 = arith.constant 1.57079637 : f32
    %28 = vector.broadcast %cst_5 : f32 to vector<8x128xf32>
    %29 = vector.broadcast %cst_6 : f32 to vector<8x128xf32>
    %30 = arith.select %27, %28, %29 : vector<8x128xi1>, vector<8x128xf32>
    %31 = arith.mulf %25, %2 : vector<8x128xf32>
    %32 = arith.subf %31, %30 : vector<8x128xf32>
    %33 = math.cos %32 : vector<8x128xf32>
    %c0_7 = arith.constant 0 : index
    %c0_8 = arith.constant 0 : index
    %34 = vector.load %arg2[%c0_7, %c0_8] : memref<32x8xf32, #tpu.memory_space<vmem>>, vector<32x8xf32>
    %cst_9 = arith.constant dense<0.000000e+00> : vector<32x128xf32>
    %35 = tpu.matmul %34, %33, %cst_9 {dimension_numbers = #tpu.dot_dimension_numbers<[1], [0], [0], [1], [0, 0, 1, 1], [], []>} : vector<32x8xf32>, vector<8x128xf32>, vector<32x128xf32> -> vector<32x128xf32>
    %cst_10 = arith.constant 0.000000e+00 : f32
    %36 = vector.broadcast %cst_10 : f32 to vector<32x128xf32>
    %37 = arith.maximumf %35, %36 : vector<32x128xf32>
    %c0_11 = arith.constant 0 : index
    %c0_12 = arith.constant 0 : index
    %38 = vector.load %arg3[%c0_11, %c0_12] : memref<32x32xf32, #tpu.memory_space<vmem>>, vector<32x32xf32>
    %cst_13 = arith.constant dense<0.000000e+00> : vector<32x128xf32>
    %39 = tpu.matmul %38, %37, %cst_13 {dimension_numbers = #tpu.dot_dimension_numbers<[1], [0], [0], [1], [0, 0, 1, 1], [], []>} : vector<32x32xf32>, vector<32x128xf32>, vector<32x128xf32> -> vector<32x128xf32>
    %c0_14 = arith.constant 0 : index
    %c0_15 = arith.constant 0 : index
    %40 = vector.load %arg4[%c0_14, %c0_15] : memref<32x1xf32, #tpu.memory_space<vmem>>, vector<32x1xf32>
    %41 = vector.broadcast %40 : vector<32x1xf32> to vector<32x128xf32>
    %42 = arith.addf %39, %41 : vector<32x128xf32>
    %cst_16 = arith.constant 0.000000e+00 : f32
    %43 = vector.broadcast %cst_16 : f32 to vector<32x128xf32>
    %44 = arith.maximumf %42, %43 : vector<32x128xf32>
    %c0_17 = arith.constant 0 : index
    %c0_18 = arith.constant 0 : index
    %45 = vector.load %arg5[%c0_17, %c0_18] : memref<1x32xf32, #tpu.memory_space<vmem>>, vector<1x32xf32>
    %cst_19 = arith.constant dense<0.000000e+00> : vector<1x128xf32>
    %46 = tpu.matmul %45, %44, %cst_19 {dimension_numbers = #tpu.dot_dimension_numbers<[1], [0], [0], [1], [0, 0, 1, 1], [], []>} : vector<1x32xf32>, vector<32x128xf32>, vector<1x128xf32> -> vector<1x128xf32>
    %c0_20 = arith.constant 0 : index
    %c0_21 = arith.constant 0 : index
    %47 = vector.load %arg6[%c0_20, %c0_21] : memref<1x1xf32, #tpu.memory_space<vmem>>, vector<1x1xf32>
    %48 = vector.broadcast %47 : vector<1x1xf32> to vector<1x128xf32>
    %49 = arith.addf %46, %48 : vector<1x128xf32>
    %c0_22 = arith.constant 0 : index
    %c0_23 = arith.constant 0 : index
    %50 = vector.load %arg7[%c0_22, %c0_23] : memref<1x128xf32, #tpu.memory_space<vmem>>, vector<1x128xf32>
    tpu.vector_store %arg7[%c0_22, %c0_23], %49 {strides = array<i32>} : memref<1x128xf32, #tpu.memory_space<vmem>>, vector<1x128xf32>,
    return
  }
  func.func @transform_0(%arg0: i32) -> (i32, i32) {
    %c0_i32 = arith.constant 0 : i32
    %c0_i32_0 = arith.constant 0 : i32
    return %c0_i32, %arg0 : i32, i32
  }
  func.func @transform_1(%arg0: i32) -> (i32, i32) {
    %c0_i32 = arith.constant 0 : i32
    %c0_i32_0 = arith.constant 0 : i32
    %c0_i32_1 = arith.constant 0 : i32
    return %c0_i32, %c0_i32_0 : i32, i32
  }
  func.func @transform_2(%arg0: i32) -> (i32, i32) {
    %c0_i32 = arith.constant 0 : i32
    %c0_i32_0 = arith.constant 0 : i32
    %c0_i32_1 = arith.constant 0 : i32
    return %c0_i32, %c0_i32_0 : i32, i32
  }
  func.func @transform_3(%arg0: i32) -> (i32, i32) {
    %c0_i32 = arith.constant 0 : i32
    %c0_i32_0 = arith.constant 0 : i32
    %c0_i32_1 = arith.constant 0 : i32
    return %c0_i32, %c0_i32_0 : i32, i32
  }
  func.func @transform_4(%arg0: i32) -> (i32, i32) {
    %c0_i32 = arith.constant 0 : i32
    %c0_i32_0 = arith.constant 0 : i32
    %c0_i32_1 = arith.constant 0 : i32
    return %c0_i32, %c0_i32_0 : i32, i32
  }
  func.func @transform_5(%arg0: i32) -> (i32, i32) {
    %c0_i32 = arith.constant 0 : i32
    %c0_i32_0 = arith.constant 0 : i32
    %c0_i32_1 = arith.constant 0 : i32
    return %c0_i32, %c0_i32_0 : i32, i32
  }
  func.func @transform_6(%arg0: i32) -> (i32, i32) {
    %c0_i32 = arith.constant 0 : i32
    %c0_i32_0 = arith.constant 0 : i32
    return %c0_i32, %arg0 : i32, i32
  }
}

</mosaic_0001>

<llo_original>
// kernel: tpu_custom_call.1
$region0: #{tpu_custom_call.1}
  #allocation0 [shape = 'u32[]', space=smem, size = 0x4, offset = 0x4, fixed_abs, tag = 'smem constant byte address 0x4 - core index']
  #allocation1 [shape = 'u32[144,128]{1,0:T(1,128)}', space=vmem, size = 0x12000, scoped, tag = 'internal scratch']
  #allocation2 [shape = 'f32[1,1]{1,0:T(1,128)S(1)}', space=vmem, size = 0x200, scoped, tag = 'scoped memory for tpu_custom_call.1']
  %s0 = inlined_call_operand.vmem [shape: f32[1,128], index: 0, kind: input, shape index: {}]
  %s1 = inlined_call_operand.vmem [shape: f32[32,8], index: 1, kind: input, shape index: {}]
  %s2 = inlined_call_operand.vmem [shape: f32[32,32], index: 2, kind: input, shape index: {}]
  %s3 = inlined_call_operand.vmem [shape: f32[32,1], index: 3, kind: input, shape index: {}]
  %s4 = inlined_call_operand.vmem [shape: f32[1,32], index: 4, kind: input, shape index: {}]
  %s5 = inlined_call_operand.<no memory space> [shape: f32[1,1], index: 5, kind: input, shape index: {}]
  %s6 = inlined_call_operand.hbm [shape: f32[1,128], index: 6, kind: output, shape index: {}]
  %s7 = sld [smem:[#allocation0]]
  $region34: #{tpu_custom_call.1} parent=0
    _
  %s9 = ssub.s32 1, %s7
  %s10 = scalar_select 0, %s9, %s7
  %v11 = vstv %s5
  %12 = vst [vmem:[#allocation2] sm:$0x1] %v11
  $region1: #{tpu_custom_call.1} parent=0
    #allocation3 [shape = 'u8[512]{0}', space=vmem, size = 0x400, scoped, tag = 'output window, operand 0, single buffered']
    #allocation4 [shape = 's32[1]{0}', space=sflag, size = 0x4, scoped, tag = 'scoped memory for tpu_custom_call.1']
    %13 = vsyncpa [#allocation4], 0
    // Predicated region
    $region2: #{tpu_custom_call.1} parent=1 // pred_check
      _
    $region3: #{tpu_custom_call.1} parent=1 // pred_check_branch
      %15 = sbr.rel (0) target = $region5
    $region4: #{tpu_custom_call.1} parent=1 // pred_region
      _
    $region5: #{tpu_custom_call.1} parent=1 // pred_fallthru
      _
    // Predicated region
    $region6: #{tpu_custom_call.1} parent=1 // pred_check
      _
    $region7: #{tpu_custom_call.1} parent=1 // pred_check_branch
      %17 = sbr.rel (0) target = $region9
    $region8: #{tpu_custom_call.1} parent=1 // pred_region
      _
    $region9: #{tpu_custom_call.1} parent=1 // pred_fallthru
      _
    // Predicated region
    $region10: #{tpu_custom_call.1} parent=1 // pred_check
      _
    $region11: #{tpu_custom_call.1} parent=1 // pred_check_branch
      %19 = sbr.rel (0) target = $region13
    $region12: #{tpu_custom_call.1} parent=1 // pred_region
      _
    $region13: #{tpu_custom_call.1} parent=1 // pred_fallthru
      _
    // Predicated region
    $region14: #{tpu_custom_call.1} parent=1 // pred_check
      _
    $region15: #{tpu_custom_call.1} parent=1 // pred_check_branch
      %21 = sbr.rel (0) target = $region17
    $region16: #{tpu_custom_call.1} parent=1 // pred_region
      _
    $region17: #{tpu_custom_call.1} parent=1 // pred_fallthru
      _
    // Predicated region
    $region18: #{tpu_custom_call.1} parent=1 // pred_check
      _
    $region19: #{tpu_custom_call.1} parent=1 // pred_check_branch
      %23 = sbr.rel (0) target = $region21
    $region20: #{tpu_custom_call.1} parent=1 // pred_region
      _
    $region21: #{tpu_custom_call.1} parent=1 // pred_fallthru
      _
    // Predicated region
    $region22: #{tpu_custom_call.1} parent=1 // pred_check
      _
    $region23: #{tpu_custom_call.1} parent=1 // pred_check_branch
      %25 = sbr.rel (0) target = $region25
    $region24: #{tpu_custom_call.1} parent=1 // pred_region
      _
    $region25: #{tpu_custom_call.1} parent=1 // pred_fallthru
      _
    %v26 = vld [vmem:[%s0] sm:$0x1]
    %v28 = vlaneseq
    %v29 = vshrl.u32 %v28, 7
    %v30 = vsub.s32 0, %v29
    %v31 = vrot.slane %v26, %v30
    %v33 = vlaneseq
    %v34 = vshrl.u32 %v33, 7
    %vm35 = vcmp.eq.s32.totalorder %v34, 1
    %vm36 = vcmp.eq.s32.totalorder %v34, 4
    %vm37 = vmor %vm35, %vm36
    %vm38 = vcmp.eq.s32.totalorder %v34, 2
    %vm39 = vcmp.eq.s32.totalorder %v34, 5
    %vm40 = vmor %vm38, %vm39
    %vm41 = vcmp.eq.s32.totalorder %v34, 3
    %vm42 = vcmp.eq.s32.totalorder %v34, 6
    %vm43 = vmor %vm41, %vm42
    %v44 = vsel %vm43, 25.132742, 0.0
    %v45 = vsel %vm40, 12.566371, %v44
    %v46 = vsel %vm37, 6.2831855, %v45
    %vm47 = vcmp.le.s32.totalorder %v34, 3
    %v48 = vsel %vm47, 0.0, 1.5707964
    %v49 = vmul.f32 %v46, %v31
    %v50 = vsub.f32 %v49, %v48
    %v51 = vand.u32 2147483647, %v50
    %vm52 = vcmp.le.f32.partialorder %v51, 0.7853982
    %vm53 = vcmp.lt.s32.totalorder %v50, 0
    %v54 = vand.u32 %v50, 2139095040
    %v55 = vshrl.u32 %v54, 23
    %v56 = vsub.s32 %v55, 127
    %v57 = vand.u32 2147483647, %v50
    %v58 = vand.u32 %v57, 8388607
    %v59 = vor.u32 %v58, 8388608
    %v60 = vsub.s32 0, %v59
    %v61 = vadd.s32 %v56, 1
    %vm62 = vcmp.gt.s32.totalorder %v61, 0
    %v63 = vsel %vm62, %v61, 0
    %v64 = vshrl.u32 %v63, 5
    %v65 = vand.u32 %v63, 31
    %v66 = vsub.s32 32, %v65
    %v67 = vshrl.u32 683565275, %v66
    %v68 = vshll.u32 683565275, %v65
    %v69 = vshrl.u32 2475754826, %v66
    %v70 = vor.u32 %v68, %v69
    %v71 = vshll.u32 2475754826, %v65
    %v72 = vshrl.u32 2131351028, %v66
    %v73 = vor.u32 %v71, %v72
    %v74 = vshll.u32 2131351028, %v65
    %v75 = vshrl.u32 2102212464, %v66
    %v76 = vor.u32 %v74, %v75
    %v77 = vshll.u32 2102212464, %v65
    %v78 = vshrl.u32 920167782, %v66
    %v79 = vor.u32 %v77, %v78
    %v80 = vshll.u32 920167782, %v65
    %v81 = vshrl.u32 1326507024, %v66
    %v82 = vor.u32 %v80, %v81
    %vm83 = vcmp.lt.s32.totalorder %v64, 1
    %vm84 = vcmp.lt.s32.totalorder %v64, 2
    %vm85 = vcmp.lt.s32.totalorder %v64, 3
    %vm86 = vcmp.lt.s32.totalorder %v64, 4
    %v87 = vsel %vm83, %v67, %v70
    %v88 = vsel %vm86, %v76, 2102212464
    %v89 = vsel %vm85, %v73, %v88
    %v90 = vsel %vm84, %v87, %v89
    %v91 = vsel %vm83, %v70, %v73
    %v92 = vsel %vm86, %v79, 920167782
    %v93 = vsel %vm85, %v76, %v92
    %v94 = vsel %vm84, %v91, %v93
    %v95 = vsel %vm83, %v73, %v76
    %v96 = vsel %vm86, %v82, 1326507024
    %v97 = vsel %vm85, %v79, %v96
    %v98 = vsel %vm84, %v95, %v97
    %v99 = vshll.u32 %v59, 8
    %v100 = vmul.u32.u64.compose %v99, %v98
    %v101 = vextract.low.u32 %v100
    %v102 = vextract.high.u32 %v100
    %v103 = vmul.u32.u64.compose %v99, %v94
    %v104 = vextract.low.u32 %v103
    %v105 = vextract.high.u32 %v103
    %v106 = vmul.u32 %v99, %v90
    %v107 = vadd.s32 %v102, %v104
    %vm108 = vc.u32 %v102, %v104
    %v109 = vadd.s32 %v105, 1
    %v110 = vsel %vm108, %v109, %v105
    %v111 = vadd.s32 %v106, %v110
    %v112 = vadd.s32 %v111, 536870912
    %v113 = vshrl.u32 %v112, 30
    %v114 = vshll.u32 %v113, 30
    %v115 = vsub.s32 %v111, %v114
    %vm116 = vcmp.lt.s32.totalorder %v115, 0
    %v117 = vsub.s32 0, %v115
    %v118 = vsel %vm116, %v117, %v115
    %v119 = vclz %v118
    %v120 = vsub.s32 %v119, 2
    %vm121 = vcmp.gt.s32.totalorder 0, %v120
    %v122 = vsel %vm121, 0, %v120
    %v123 = vsub.s32 32, %v122
    %v124 = vshll.u32 %v115, %v122
    %v125 = vshrl.u32 %v107, %v123
    %v126 = vor.u32 %v124, %v125
    %v127 = vsub.s32 4294967266, %v122
    %v128 = vadd.s32 %v127, 127
    %v129 = vshll.u32 %v128, 23
    %v130 = vor.u32 4788187, %v129
    %v131 = vand.u32 2147483647, %v130
    %v133 = vcvt.s32.f32 %v126
    %v134 = vmul.f32 %v133, %v131
    %v135 = vxor.u32 %v134, 2147483648
    %v136 = vsel %vm53, %v135, %v134
    %v137 = vsub.s32 4, %v113
    %v138 = vsel %vm53, %v137, %v113
    %v139 = vsel %vm52, %v50, %v136
    %v140 = vsel %vm52, 0, %v138
    %v141 = vcosq.f32.pop %v139
    %v142 = vsinq.f32.pop %v139
    %vm143 = vweird.f32 %v50
    %v144 = vand.u32 %v140, 3
    %vm145 = vcmp.lt.s32.totalorder %v144, 2
    %vm146 = vcmp.eq.s32.totalorder %v144, 0
    %v147 = vxor.u32 %v142, 2147483648
    %v148 = vsel %vm146, %v141, %v147
    %vm149 = vcmp.eq.s32.totalorder %v144, 2
    %v150 = vxor.u32 %v141, 2147483648
    %v151 = vsel %vm149, %v150, %v142
    %v152 = vsel %vm145, %v148, %v151
    %v153 = vsel %vm143, nan, %v152
    %v154 = vld [vmem:[%s1] sm:$0xff]
    %v155 = vld [vmem:[%s1 + $0x8] sm:$0xff]
    %v156 = vld [vmem:[%s1 + $0x10] sm:$0xff]
    %v157 = vld [vmem:[%s1 + $0x18] sm:$0xff]
    %vm158 = vcmask 64512
    %v160 = vsel %vm158, %v154, 0
    %v163 = vsel %vm158, %v155, 0
    %v166 = vsel %vm158, %v156, 0
    %v169 = vsel %vm158, %v157, 0
    %171 = vmatprep.subr.mxu0 0.0
    %172 = vmatpush1.msra.mxu0 %v153
    %173 = vmatprep.subr.mxu0 0.0
    %174 = vmatpush1.msra.mxu0 0.0
    %175 = vmatprep.subr.mxu0 0.0
    %176 = vmatpush1.msra.mxu0 0.0
    %177 = vmatprep.subr.mxu0 0.0
    %178 = vmatpush1.msra.mxu0 0.0
    %179 = vmatprep.subr.mxu0 0.0
    %180 = vmatpush1.msra.mxu0 0.0
    %181 = vmatprep.subr.mxu0 0.0
    %182 = vmatpush1.msra.mxu0 0.0
    %183 = vmatprep.subr.mxu0 0.0
    %184 = vmatpush1.msra.mxu0 0.0
    %185 = vmatprep.subr.mxu0 0.0
    %186 = vmatpush1.msra.mxu0 0.0
    %187 = vmatprep.subr.mxu0 0.0
    %188 = vmatpush1.msra.mxu0 0.0
    %189 = vmatprep.subr.mxu0 0.0
    %190 = vmatpush1.msra.mxu0 0.0
    %191 = vmatprep.subr.mxu0 0.0
    %192 = vmatpush1.msra.mxu0 0.0
    %193 = vmatprep.subr.mxu0 0.0
    %194 = vmatpush1.msra.mxu0 0.0
    %195 = vmatprep.subr.mxu0 0.0
    %196 = vmatpush1.msra.mxu0 0.0
    %197 = vmatprep.subr.mxu0 0.0
    %198 = vmatpush1.msra.mxu0 0.0
    %199 = vmatprep.subr.mxu0 0.0
    %200 = vmatpush1.msra.mxu0 0.0
    %201 = vmatprep.subr.mxu0 0.0
    %202 = vmatpush1.msra.mxu0 0.0
    %203 = vmatprep.subr.mxu0 0.0
    %204 = vmatpush1.msra.mxu0 0.0
    %205 = vmatprep.subr.mxu0 0.0
    %206 = vmatpush1.msra.mxu0 0.0
    %207 = vmatprep.subr.mxu0 0.0
    %208 = vmatpush1.msra.mxu0 0.0
    %209 = vmatprep.subr.mxu0 0.0
    %210 = vmatpush1.msra.mxu0 0.0
    %211 = vmatprep.subr.mxu0 0.0
    %212 = vmatpush1.msra.mxu0 0.0
    %213 = vmatprep.subr.mxu0 0.0
    %214 = vmatpush1.msra.mxu0 0.0
    %215 = vmatprep.subr.mxu0 0.0
    %216 = vmatpush1.msra.mxu0 0.0
    %217 = vmatprep.subr.mxu0 0.0
    %218 = vmatpush1.msra.mxu0 0.0
    %219 = vmatprep.subr.mxu0 0.0
    %220 = vmatpush1.msra.mxu0 0.0
    %221 = vmatprep.subr.mxu0 0.0
    %222 = vmatpush1.msra.mxu0 0.0
    %223 = vmatprep.subr.mxu0 0.0
    %224 = vmatpush1.msra.mxu0 0.0
    %225 = vmatprep.subr.mxu0 0.0
    %226 = vmatpush1.msra.mxu0 0.0
    %227 = vmatprep.subr.mxu0 0.0
    %228 = vmatpush1.msra.mxu0 0.0
    %229 = vmatprep.subr.mxu0 0.0
    %230 = vmatpush1.msra.mxu0 0.0
    %231 = vmatprep.subr.mxu0 0.0
    %232 = vmatpush1.msra.mxu0 0.0
    %233 = vmatprep.subr.mxu0 0.0
    %234 = vmatpush1.msra.mxu0 0.0
    %235 = vmatprep.mubr.f32.mxu0 0.0
    %236 = vmatmul.mubr.f32.gmra.mrb[0].mxu0 %v160
    %v237 = vpop.f32.mrb[0].mxu0
    %v238 = vadd.f32 0.0, %v237
    %v239 = vpop.f32.mrb[0].mxu0
    %240 = vmatprep.mubr.f32.mxu0 0.0
    %241 = vmatmul.mubr.f32.gmra.mrb[0].mxu0 %v163
    %v242 = vpop.f32.mrb[0].mxu0
    %v243 = vadd.f32 0.0, %v242
    %v244 = vpop.f32.mrb[0].mxu0
    %245 = vmatprep.mubr.f32.mxu0 0.0
    %246 = vmatmul.mubr.f32.gmra.mrb[0].mxu0 %v166
    %v247 = vpop.f32.mrb[0].mxu0
    %v248 = vadd.f32 0.0, %v247
    %v249 = vpop.f32.mrb[0].mxu0
    %250 = vmatprep.mubr.f32.mxu0 0.0
    %251 = vmatmul.mubr.f32.gmra.mrb[0].mxu0 %v169
    %v252 = vpop.f32.mrb[0].mxu0
    %v253 = vadd.f32 0.0, %v252
    %v254 = vpop.f32.mrb[0].mxu0
    %255 = vdwg.mxu0
    %v256 = vmax.f32 %v238, 0.0
    %v257 = vmax.f32 %v243, 0.0
    %v258 = vmax.f32 %v248, 0.0
    %v259 = vmax.f32 %v253, 0.0
    %v260 = vld [vmem:[%s2] sm:$0xff]
    %v261 = vld [vmem:[%s2 + $0x8] sm:$0xff]
    %v262 = vld [vmem:[%s2 + $0x10] sm:$0xff]
    %v263 = vld [vmem:[%s2 + $0x18] sm:$0xff]
    %v264 = vld [vmem:[%s3] sm:$0xff]
    %v265 = vld [vmem:[%s3 + $0x8] sm:$0xff]
    %v266 = vld [vmem:[%s3 + $0x10] sm:$0xff]
    %v267 = vld [vmem:[%s3 + $0x18] sm:$0xff]
    %269 = vset.pattern.permute.xlu0 0
    %270 = vperm.xlu0 %269, %v264
    %v271 = vpop.permute.xlu0 %270
    %274 = vset.pattern.permute.xlu0 0
    %275 = vperm.xlu0 %274, %v265
    %v276 = vpop.permute.xlu0 %275
    %279 = vset.pattern.permute.xlu0 0
    %280 = vperm.xlu0 %279, %v266
    %v281 = vpop.permute.xlu0 %280
    %284 = vset.pattern.permute.xlu0 0
    %285 = vperm.xlu0 %284, %v267
    %v286 = vpop.permute.xlu0 %285
    %vm288 = vcmask 261120
    %v290 = vsel %vm288, %v260, 0
    %v293 = vsel %vm288, %v261, 0
    %v296 = vsel %vm288, %v262, 0
    %v299 = vsel %vm288, %v263, 0
    %301 = vmatprep.subr.mxu0 0.0
    %302 = vmatpush1.msra.mxu0 %v256
    %303 = vmatprep.subr.mxu0 0.0
    %304 = vmatpush1.msra.mxu0 %v257
    %305 = vmatprep.subr.mxu0 0.0
    %306 = vmatpush1.msra.mxu0 %v258
    %307 = vmatprep.subr.mxu0 0.0
    %308 = vmatpush1.msra.mxu0 %v259
    %309 = vmatprep.subr.mxu0 0.0
    %310 = vmatpush1.msra.mxu0 0.0
    %311 = vmatprep.subr.mxu0 0.0
    %312 = vmatpush1.msra.mxu0 0.0
    %313 = vmatprep.subr.mxu0 0.0
    %314 = vmatpush1.msra.mxu0 0.0
    %315 = vmatprep.subr.mxu0 0.0
    %316 = vmatpush1.msra.mxu0 0.0
    %317 = vmatprep.subr.mxu0 0.0
    %318 = vmatpush1.msra.mxu0 0.0
    %319 = vmatprep.subr.mxu0 0.0
    %320 = vmatpush1.msra.mxu0 0.0
    %321 = vmatprep.subr.mxu0 0.0
    %322 = vmatpush1.msra.mxu0 0.0
    %323 = vmatprep.subr.mxu0 0.0
    %324 = vmatpush1.msra.mxu0 0.0
    %325 = vmatprep.subr.mxu0 0.0
    %326 = vmatpush1.msra.mxu0 0.0
    %327 = vmatprep.subr.mxu0 0.0
    %328 = vmatpush1.msra.mxu0 0.0
    %329 = vmatprep.subr.mxu0 0.0
    %330 = vmatpush1.msra.mxu0 0.0
    %331 = vmatprep.subr.mxu0 0.0
    %332 = vmatpush1.msra.mxu0 0.0
    %333 = vmatprep.subr.mxu0 0.0
    %334 = vmatpush1.msra.mxu0 0.0
    %335 = vmatprep.subr.mxu0 0.0
    %336 = vmatpush1.msra.mxu0 0.0
    %337 = vmatprep.subr.mxu0 0.0
    %338 = vmatpush1.msra.mxu0 0.0
    %339 = vmatprep.subr.mxu0 0.0
    %340 = vmatpush1.msra.mxu0 0.0
    %341 = vmatprep.subr.mxu0 0.0
    %342 = vmatpush1.msra.mxu0 0.0
    %343 = vmatprep.subr.mxu0 0.0
    %344 = vmatpush1.msra.mxu0 0.0
    %345 = vmatprep.subr.mxu0 0.0
    %346 = vmatpush1.msra.mxu0 0.0
    %347 = vmatprep.subr.mxu0 0.0
    %348 = vmatpush1.msra.mxu0 0.0
    %349 = vmatprep.subr.mxu0 0.0
    %350 = vmatpush1.msra.mxu0 0.0
    %351 = vmatprep.subr.mxu0 0.0
    %352 = vmatpush1.msra.mxu0 0.0
    %353 = vmatprep.subr.mxu0 0.0
    %354 = vmatpush1.msra.mxu0 0.0
    %355 = vmatprep.subr.mxu0 0.0
    %356 = vmatpush1.msra.mxu0 0.0
    %357 = vmatprep.subr.mxu0 0.0
    %358 = vmatpush1.msra.mxu0 0.0
    %359 = vmatprep.subr.mxu0 0.0
    %360 = vmatpush1.msra.mxu0 0.0
    %361 = vmatprep.subr.mxu0 0.0
    %362 = vmatpush1.msra.mxu0 0.0
    %363 = vmatprep.subr.mxu0 0.0
    %364 = vmatpush1.msra.mxu0 0.0
    %365 = vmatprep.mubr.f32.mxu0 0.0
    %366 = vmatmul.mubr.f32.gmra.mrb[0].mxu0 %v290
    %v367 = vpop.f32.mrb[0].mxu0
    %v368 = vadd.f32 %v271, %v367
    %v369 = vpop.f32.mrb[0].mxu0
    %370 = vmatprep.mubr.f32.mxu0 0.0
    %371 = vmatmul.mubr.f32.gmra.mrb[0].mxu0 %v293
    %v372 = vpop.f32.mrb[0].mxu0
    %v373 = vadd.f32 %v276, %v372
    %v374 = vpop.f32.mrb[0].mxu0
    %375 = vmatprep.mubr.f32.mxu0 0.0
    %376 = vmatmul.mubr.f32.gmra.mrb[0].mxu0 %v296
    %v377 = vpop.f32.mrb[0].mxu0
    %v378 = vadd.f32 %v281, %v377
    %v379 = vpop.f32.mrb[0].mxu0
    %380 = vmatprep.mubr.f32.mxu0 0.0
    %381 = vmatmul.mubr.f32.gmra.mrb[0].mxu0 %v299
    %v382 = vpop.f32.mrb[0].mxu0
    %v383 = vadd.f32 %v286, %v382
    %v384 = vpop.f32.mrb[0].mxu0
    %385 = vdwg.mxu0
    %v386 = vmax.f32 %v368, 0.0
    %v387 = vmax.f32 %v373, 0.0
    %v388 = vmax.f32 %v378, 0.0
    %v389 = vmax.f32 %v383, 0.0
    %v390 = vld [vmem:[%s4] sm:$0x1]
    %v391 = vld [vmem:[#allocation2] sm:$0x1]
    %393 = vset.pattern.permute.xlu0 0
    %394 = vperm.xlu0 %393, %v391
    %v395 = vpop.permute.xlu0 %394
    %v397 = vlaneseq
    %v398 = vshrl.u32 %v397, 7
    %v399 = vsub.s32 0, %v398
    %v400 = vrot.slane %v395, %v399
    %v402 = vsel %vm288, %v390, 0
    %404 = vmatprep.subr.mxu0 0.0
    %405 = vmatpush1.msra.mxu0 %v386
    %406 = vmatprep.subr.mxu0 0.0
    %407 = vmatpush1.msra.mxu0 %v387
    %408 = vmatprep.subr.mxu0 0.0
    %409 = vmatpush1.msra.mxu0 %v388
    %410 = vmatprep.subr.mxu0 0.0
    %411 = vmatpush1.msra.mxu0 %v389
    %412 = vmatprep.subr.mxu0 0.0
    %413 = vmatpush1.msra.mxu0 0.0
    %414 = vmatprep.subr.mxu0 0.0
    %415 = vmatpush1.msra.mxu0 0.0
    %416 = vmatprep.subr.mxu0 0.0
    %417 = vmatpush1.msra.mxu0 0.0
    %418 = vmatprep.subr.mxu0 0.0
    %419 = vmatpush1.msra.mxu0 0.0
    %420 = vmatprep.subr.mxu0 0.0
    %421 = vmatpush1.msra.mxu0 0.0
    %422 = vmatprep.subr.mxu0 0.0
    %423 = vmatpush1.msra.mxu0 0.0
    %424 = vmatprep.subr.mxu0 0.0
    %425 = vmatpush1.msra.mxu0 0.0
    %426 = vmatprep.subr.mxu0 0.0
    %427 = vmatpush1.msra.mxu0 0.0
    %428 = vmatprep.subr.mxu0 0.0
    %429 = vmatpush1.msra.mxu0 0.0
    %430 = vmatprep.subr.mxu0 0.0
    %431 = vmatpush1.msra.mxu0 0.0
    %432 = vmatprep.subr.mxu0 0.0
    %433 = vmatpush1.msra.mxu0 0.0
    %434 = vmatprep.subr.mxu0 0.0
    %435 = vmatpush1.msra.mxu0 0.0
    %436 = vmatprep.subr.mxu0 0.0
    %437 = vmatpush1.msra.mxu0 0.0
    %438 = vmatprep.subr.mxu0 0.0
    %439 = vmatpush1.msra.mxu0 0.0
    %440 = vmatprep.subr.mxu0 0.0
    %441 = vmatpush1.msra.mxu0 0.0
    %442 = vmatprep.subr.mxu0 0.0
    %443 = vmatpush1.msra.mxu0 0.0
    %444 = vmatprep.subr.mxu0 0.0
    %445 = vmatpush1.msra.mxu0 0.0
    %446 = vmatprep.subr.mxu0 0.0
    %447 = vmatpush1.msra.mxu0 0.0
    %448 = vmatprep.subr.mxu0 0.0
    %449 = vmatpush1.msra.mxu0 0.0
    %450 = vmatprep.subr.mxu0 0.0
    %451 = vmatpush1.msra.mxu0 0.0
    %452 = vmatprep.subr.mxu0 0.0
    %453 = vmatpush1.msra.mxu0 0.0
    %454 = vmatprep.subr.mxu0 0.0
    %455 = vmatpush1.msra.mxu0 0.0
    %456 = vmatprep.subr.mxu0 0.0
    %457 = vmatpush1.msra.mxu0 0.0
    %458 = vmatprep.subr.mxu0 0.0
    %459 = vmatpush1.msra.mxu0 0.0
    %460 = vmatprep.subr.mxu0 0.0
    %461 = vmatpush1.msra.mxu0 0.0
    %462 = vmatprep.subr.mxu0 0.0
    %463 = vmatpush1.msra.mxu0 0.0
    %464 = vmatprep.subr.mxu0 0.0
    %465 = vmatpush1.msra.mxu0 0.0
    %466 = vmatprep.subr.mxu0 0.0
    %467 = vmatpush1.msra.mxu0 0.0
    %468 = vmatprep.mubr.f32.mxu0 0.0
    %469 = vmatmul.mubr.f32.gmra.mrb[0].mxu0 %v402
    %v470 = vpop.f32.mrb[0].mxu0
    %v471 = vadd.f32 %v400, %v470
    %v472 = vpop.f32.mrb[0].mxu0
    %473 = vdwg.mxu0
    %474 = vst [vmem:[#allocation3] sm:$0x1] %v471
    // Predicated region
    $region26: #{tpu_custom_call.1} parent=1 // pred_check
      _
    $region27: #{tpu_custom_call.1} parent=1 // pred_check_branch
      %476 = sbr.rel (0) target = $region29
    $region28: #{tpu_custom_call.1} parent=1 // pred_region
      %s478 = ssub.s32 16, 16
      %479 = vsyncadd [#allocation4], %s478
      %s481 = sshll.u32 [#allocation3], 4
      %s482 = int_to_ptr.vmem [resolvable:$true] %s481
      %484 = dma.vmem_to_hbm [thread:$0]  %s482, 16, %s6, [#allocation4]
    $region29: #{tpu_custom_call.1} parent=1 // pred_fallthru
      _
    // Predicated region
    $region30: #{tpu_custom_call.1} parent=1 // pred_check
      _
    $region31: #{tpu_custom_call.1} parent=1 // pred_check_branch
      %486 = sbr.rel (0) target = $region33
    $region32: #{tpu_custom_call.1} parent=1 // pred_region
      %487 = dma.done [#allocation4], 16
    $region33: #{tpu_custom_call.1} parent=1 // pred_fallthru
      _
    %488 = vsyncpa [#allocation4], 1

</llo_original>
